<compile_context>
chip_gen: v7x
topology: tpu7x:2x2x1
jax: 0.10.0
libtpu: 0.0.40
codegen_flags: <defaults>
</compile_context>

<pallas_src>
import functools

import jax
import jax.numpy as jnp
from jax import lax
from jax.experimental import pallas as pl
from jax.experimental.pallas import tpu as pltpu


def _frozen_bn_kernel(params_ref, x_ref, o_ref, *, fuse_relu):
    # params_ref: (r_blk, 2) f32 with [:, 0] = scale, [:, 1] = shift
    # x_ref / o_ref: (r_blk, l_blk) in the I/O dtype
    p = params_ref[...]
    s = p[:, 0:1]
    b = p[:, 1:2]
    y = x_ref[...] * s + b          # promotes to f32 via the f32 scale
    if fuse_relu:
        y = jnp.maximum(y, 0.0)
    o_ref[...] = y.astype(o_ref.dtype)


def _round_up(x, m):
    return ((x + m - 1) // m) * m


def _choose_blocks(n_rows, n_lanes, itemsize, *, target_bytes=2 << 20, min_steps=8):
    """Pick (r_blk, l_blk): ~target_bytes per input block, sublane-rounded rows,
    128-multiple lane tiles when a minimal block would already be too big, and
    enough grid steps for megacore + double-buffering."""
    sub = {4: 8, 2: 16, 1: 32}.get(itemsize, 8)

    # Lane tiling only when even a minimal (sub, L) block would blow the target.
    if n_lanes > 128 and sub * n_lanes * itemsize > target_bytes:
        l_blk = (target_bytes // (sub * itemsize)) // 128 * 128
        l_blk = max(128, min(l_blk, (n_lanes // 128) * 128))
    else:
        l_blk = n_lanes

    r_blk = (target_bytes // max(l_blk * itemsize, 1)) // sub * sub
    r_blk = max(sub, min(r_blk, _round_up(n_rows, sub)))

    # Guarantee >= min_steps grid steps (>= ~4 per v7x TensorCore) when the
    # tensor is big enough; for tiny tensors this bottoms out at one block.
    while (pl.cdiv(n_rows, r_blk) * pl.cdiv(n_lanes, l_blk) < min_steps
           and r_blk > sub):
        r_blk = max(sub, (r_blk // 2) // sub * sub)
    return r_blk, l_blk


def prepare_frozen_bn_params(weight, bias, running_mean, running_var, eps=1e-5):
    """Fold the frozen statistics once (O(C) work) -> (C, 2) f32 [scale, shift].

    Call this at model-load time and reuse the result for every forward."""
    w = weight.astype(jnp.float32)
    b = bias.astype(jnp.float32)
    rm = running_mean.astype(jnp.float32)
    rv = running_var.astype(jnp.float32)
    scale = w * lax.rsqrt(rv + eps)        # w * (rv + eps).rsqrt()
    shift = b - rm * scale                 # b - rm * scale
    return jnp.stack([scale, shift], axis=-1)


def frozen_batch_norm_2d_apply(x, folded_params, *, fuse_relu=False):
    """Apply pre-folded FrozenBatchNorm2d. x: (N, C, H, W); folded_params: (C, 2)."""
    N, C, H, W = x.shape
    R, L = N * C, H * W
    itemsize = jnp.dtype(x.dtype).itemsize

    # Per-row (N*C, 2) view of the per-channel params (single tiny DMA per block).
    params_rows = jnp.broadcast_to(folded_params[None], (N, C, 2)).reshape(R, 2)

    # Lane-dense 2-D view of x (contiguous reshape, no copy).
    x2 = x.reshape(R, L)

    r_blk, l_blk = _choose_blocks(R, L, itemsize)
    grid = (pl.cdiv(R, r_blk), pl.cdiv(L, l_blk))

    # VMEM budget from the actual footprint: double-buffered in + out blocks and
    # the (lane-padded) param blocks, plus headroom. Stays well under v7x 64 MiB.
    blk_bytes = r_blk * l_blk * itemsize
    param_bytes = r_blk * 128 * 4            # (r_blk, 2) pads to 128 lanes in VMEM
    footprint = 2 * (2 * blk_bytes + param_bytes)
    vmem_limit = int(min(60 << 20, max(16 << 20, footprint + (8 << 20))))

    param_spec = pl.BlockSpec((r_blk, 2), lambda i, j: (i, 0))
    x_spec = pl.BlockSpec((r_blk, l_blk), lambda i, j: (i, j))

    out2 = pl.pallas_call(
        functools.partial(_frozen_bn_kernel, fuse_relu=fuse_relu),
        out_shape=jax.ShapeDtypeStruct((R, L), x.dtype),
        grid_spec=pltpu.PrefetchScalarGridSpec(
            num_scalar_prefetch=0,
            grid=grid,
            in_specs=[param_spec, x_spec],
            out_specs=x_spec,
        ),
        compiler_params=pltpu.CompilerParams(
            dimension_semantics=("parallel", "parallel"),
            vmem_limit_bytes=vmem_limit,
        ),
    )(params_rows, x2)

    return out2.reshape(N, C, H, W)


def frozen_batch_norm_2d(x, weight, bias, running_mean, running_var,
                         eps=1e-5, fuse_relu=False):
    """Convenience wrapper matching the PyTorch module's forward signature."""
    params = prepare_frozen_bn_params(weight, bias, running_mean, running_var, eps)
    return frozen_batch_norm_2d_apply(x, params, fuse_relu=fuse_relu)


def _reference(x, weight, bias, running_mean, running_var, eps=1e-5):
    w = weight.reshape(1, -1, 1, 1).astype(jnp.float32)
    b = bias.reshape(1, -1, 1, 1).astype(jnp.float32)
    rv = running_var.reshape(1, -1, 1, 1).astype(jnp.float32)
    rm = running_mean.reshape(1, -1, 1, 1).astype(jnp.float32)
    scale = w * lax.rsqrt(rv + eps)
    shift = b - rm * scale
    return (x.astype(jnp.float32) * scale + shift).astype(x.dtype)


if __name__ == "__main__":
    key = jax.random.PRNGKey(0)
    kx, kw, kb, km, kv = jax.random.split(key, 5)

    N, C, H, W = 2, 4, 16, 16
    x = jax.random.normal(kx, (N, C, H, W), dtype=jnp.float32)
    weight = 1.0 + 0.1 * jax.random.normal(kw, (C,), dtype=jnp.float32)
    bias = 0.1 * jax.random.normal(kb, (C,), dtype=jnp.float32)
    running_mean = 0.1 * jax.random.normal(km, (C,), dtype=jnp.float32)
    running_var = 1.0 + 0.1 * jax.random.uniform(kv, (C,), dtype=jnp.float32)

    ref = _reference(x, weight, bias, running_mean, running_var)

    # f32 path
    out = jax.block_until_ready(
        frozen_batch_norm_2d(x, weight, bias, running_mean, running_var))
    assert out.shape == x.shape and out.dtype == x.dtype
    assert jnp.allclose(out, ref, atol=1e-5, rtol=1e-5)

    # bf16 path (16-row sublane packing; ragged row block vs R=8)
    xb = x.astype(jnp.bfloat16)
    outb = jax.block_until_ready(
        frozen_batch_norm_2d(xb, weight, bias, running_mean, running_var))
    refb = _reference(xb, weight, bias, running_mean, running_var)
    assert outb.dtype == jnp.bfloat16
    assert jnp.allclose(outb.astype(jnp.float32), refb.astype(jnp.float32),
                        atol=2e-2, rtol=2e-2)

    # fused BN+ReLU path (saves a second full HBM pass in BN->ReLU chains)
    outr = jax.block_until_ready(
        frozen_batch_norm_2d(x, weight, bias, running_mean, running_var,
                             fuse_relu=True))
    assert jnp.allclose(outr, jnp.maximum(ref, 0.0), atol=1e-5, rtol=1e-5)

    # ragged shape: R=6 rows (not a sublane multiple), L=49 lanes (< 128)
    x2 = jax.random.normal(kx, (2, 3, 7, 7), dtype=jnp.float32)
    w2 = 1.0 + 0.1 * jax.random.normal(kw, (3,), dtype=jnp.float32)
    b2 = 0.1 * jax.random.normal(kb, (3,), dtype=jnp.float32)
    m2 = 0.1 * jax.random.normal(km, (3,), dtype=jnp.float32)
    v2 = 1.0 + 0.1 * jax.random.uniform(kv, (3,), dtype=jnp.float32)
    out2 = jax.block_until_ready(frozen_batch_norm_2d(x2, w2, b2, m2, v2))
    assert jnp.allclose(out2, _reference(x2, w2, b2, m2, v2), atol=1e-5, rtol=1e-5)

    print("KERNEL_OK")
</pallas_src>

<mosaic_0001>
module attributes {stable_mosaic.version = 11 : i64} {
  func.func @_frozen_bn_kernel(%arg0: i32, %arg1: i32, %arg2: memref<8x2xf32, #tpu.memory_space<vmem>>, %arg3: memref<8x256xf32, #tpu.memory_space<vmem>>, %arg4: memref<8x256xf32, #tpu.memory_space<vmem>>) attributes {dimension_semantics = [#tpu.dimension_semantics<parallel>, #tpu.dimension_semantics<parallel>], iteration_bounds = array<i64: 1, 1>, scalar_prefetch = 0 : i64, scratch_operands = 0 : i64, tpu.core_type = #tpu.core_type<tc>, window_params = [{transform_indices = @transform_0, window_bounds = array<i64: 8, 2>}, {transform_indices = @transform_1, window_bounds = array<i64: 8, 256>}, {transform_indices = @transform_2, window_bounds = array<i64: 8, 256>}]} {
    %c0 = arith.constant 0 : index
    %c0_0 = arith.constant 0 : index
    %0 = vector.load %arg2[%c0, %c0_0] : memref<8x2xf32, #tpu.memory_space<vmem>>, vector<8x2xf32>
    %1 = vector.extract_strided_slice %0 {offsets = [0, 0], sizes = [8, 1], strides = [1, 1]} : vector<8x2xf32> to vector<8x1xf32>
    %2 = vector.extract_strided_slice %0 {offsets = [0, 1], sizes = [8, 1], strides = [1, 1]} : vector<8x2xf32> to vector<8x1xf32>
    %c0_1 = arith.constant 0 : index
    %c0_2 = arith.constant 0 : index
    %3 = vector.load %arg3[%c0_1, %c0_2] : memref<8x256xf32, #tpu.memory_space<vmem>>, vector<8x256xf32>
    %4 = vector.broadcast %1 : vector<8x1xf32> to vector<8x256xf32>
    %5 = arith.mulf %3, %4 : vector<8x256xf32>
    %6 = vector.broadcast %2 : vector<8x1xf32> to vector<8x256xf32>
    %7 = arith.addf %5, %6 : vector<8x256xf32>
    %c0_3 = arith.constant 0 : index
    %c0_4 = arith.constant 0 : index
    %8 = vector.load %arg4[%c0_3, %c0_4] : memref<8x256xf32, #tpu.memory_space<vmem>>, vector<8x256xf32>
    tpu.vector_store %arg4[%c0_3, %c0_4], %7 {strides = array<i32>} : memref<8x256xf32, #tpu.memory_space<vmem>>, vector<8x256xf32>,
    return
  }
  func.func @transform_0(%arg0: i32, %arg1: i32) -> (i32, i32) {
    %c0_i32 = arith.constant 0 : i32
    %c0_i32_0 = arith.constant 0 : i32
    return %arg0, %c0_i32 : i32, i32
  }
  func.func @transform_1(%arg0: i32, %arg1: i32) -> (i32, i32) {
    %c0_i32 = arith.constant 0 : i32
    return %arg0, %arg1 : i32, i32
  }
  func.func @transform_2(%arg0: i32, %arg1: i32) -> (i32, i32) {
    %c0_i32 = arith.constant 0 : i32
    return %arg0, %arg1 : i32, i32
  }
}

</mosaic_0001>

<llo_original>
// kernel: tpu_custom_call.1
$region0: #{tpu_custom_call.1}
  #allocation0 [shape = 'u32[]', space=smem, size = 0x4, offset = 0x4, fixed_abs, tag = 'smem constant byte address 0x4 - core index']
  #allocation1 [shape = 'u32[144,128]{1,0:T(1,128)}', space=vmem, size = 0x12000, scoped, tag = 'internal scratch']
  %s0 = inlined_call_operand.vmem [shape: f32[8,2], index: 0, kind: input, shape index: {}]
  %s1 = inlined_call_operand.hbm [shape: f32[8,256], index: 1, kind: input, shape index: {}]
  %s2 = inlined_call_operand.hbm [shape: f32[8,256], index: 2, kind: output, shape index: {}]
  %s3 = sld [smem:[#allocation0]]
  $region22: #{tpu_custom_call.1} parent=0
    _
  %s5 = ssub.s32 1, %s3
  %s6 = scalar_select 0, %s5, %s3
  $region1: #{tpu_custom_call.1} parent=0
    #allocation2 [shape = 'u8[8192]{0}', space=vmem, size = 0x2000, scoped, tag = 'input window, operand 1, single buffered']
    #allocation3 [shape = 's32[1]{0}', space=sflag, size = 0x4, scoped, tag = 'scoped memory for tpu_custom_call.1']
    #allocation4 [shape = 's32[1]{0}', space=sflag, size = 0x4, scoped, tag = 'scoped memory for tpu_custom_call.1']
    #allocation5 [shape = 'u8[8192]{0}', space=vmem, size = 0x2000, scoped, tag = 'output window, operand 0, single buffered']
    %7 = vsyncpa [#allocation3], 0
    %8 = vsyncpa [#allocation4], 0
    // Predicated region
    $region2: #{tpu_custom_call.1} parent=1 // pred_check
      _
    $region3: #{tpu_custom_call.1} parent=1 // pred_check_branch
      %10 = sbr.rel (0) target = $region5
    $region4: #{tpu_custom_call.1} parent=1 // pred_region
      _
    $region5: #{tpu_custom_call.1} parent=1 // pred_fallthru
      _
    // Predicated region
    $region6: #{tpu_custom_call.1} parent=1 // pred_check
      _
    $region7: #{tpu_custom_call.1} parent=1 // pred_check_branch
      %12 = sbr.rel (0) target = $region9
    $region8: #{tpu_custom_call.1} parent=1 // pred_region
      %s14 = ssub.s32 256, 256
      %15 = vsyncadd [#allocation3], %s14
      %s17 = sshll.u32 [#allocation2], 4
      %s18 = int_to_ptr.vmem [resolvable:$true] %s17
      %20 = dma.hbm_to_vmem [thread:$0]  %s1, 256, %s18, [#allocation3]
    $region9: #{tpu_custom_call.1} parent=1 // pred_fallthru
      _
    // Predicated region
    $region10: #{tpu_custom_call.1} parent=1 // pred_check
      _
    $region11: #{tpu_custom_call.1} parent=1 // pred_check_branch
      %22 = sbr.rel (0) target = $region13
    $region12: #{tpu_custom_call.1} parent=1 // pred_region
      %23 = dma.done [#allocation3], 256
    $region13: #{tpu_custom_call.1} parent=1 // pred_fallthru
      _
    %v24 = vld [vmem:[%s0] sm:$0xff]
    %v25 = vld [vmem:[#allocation2] sm:$0xff]
    %v26 = vld [vmem:[#allocation2 + $0x8] sm:$0xff]
    %28 = vset.pattern.permute.xlu0 0
    %29 = vperm.xlu0 %28, %v24
    %v30 = vpop.permute.xlu0 %29
    %v32 = vmul.f32 %v25, %v30
    %v33 = vmul.f32 %v26, %v30
    %34 = vset.pattern.permute.xlu0 1
    %35 = vperm.xlu0 %34, %v24
    %v36 = vpop.permute.xlu0 %35
    %v38 = vadd.f32 %v32, %v36
    %v39 = vadd.f32 %v33, %v36
    %40 = vst [vmem:[#allocation5] sm:$0xff] %v38
    %41 = vst [vmem:[#allocation5 + $0x8] sm:$0xff] %v39
    // Predicated region
    $region14: #{tpu_custom_call.1} parent=1 // pred_check
      _
    $region15: #{tpu_custom_call.1} parent=1 // pred_check_branch
      %43 = sbr.rel (0) target = $region17
    $region16: #{tpu_custom_call.1} parent=1 // pred_region
      %s45 = ssub.s32 256, 256
      %46 = vsyncadd [#allocation4], %s45
      %s48 = sshll.u32 [#allocation5], 4
      %s49 = int_to_ptr.vmem [resolvable:$true] %s48
      %51 = dma.vmem_to_hbm [thread:$0]  %s49, 256, %s2, [#allocation4]
    $region17: #{tpu_custom_call.1} parent=1 // pred_fallthru
      _
    // Predicated region
    $region18: #{tpu_custom_call.1} parent=1 // pred_check
      _
    $region19: #{tpu_custom_call.1} parent=1 // pred_check_branch
      %53 = sbr.rel (0) target = $region21
    $region20: #{tpu_custom_call.1} parent=1 // pred_region
      %54 = dma.done [#allocation4], 256
    $region21: #{tpu_custom_call.1} parent=1 // pred_fallthru
      _
    %55 = vsyncpa [#allocation3], 1
    %56 = vsyncpa [#allocation4], 1

</llo_original>
